<compile_context>
chip_gen: v5e
topology: v5e:2x2
jax: 0.10.0
libtpu: 0.0.40
codegen_flags: <defaults>
</compile_context>

<pallas_src>
import math

import jax
import jax.numpy as jnp
from jax.experimental import pallas as pl
from jax.experimental.pallas import tpu as pltpu


def _round_up(x, m):
    return ((x + m - 1) // m) * m


def _pad2(x, shape):
    pr, pc = shape[0] - x.shape[0], shape[1] - x.shape[1]
    if pr == 0 and pc == 0:
        return x
    return jnp.pad(x, ((0, pr), (0, pc)))


# ---------------------------------------------------------------------------
# Kernels
# ---------------------------------------------------------------------------
def _critic_kernel_scalar_head(s_ref, a_ref, w1_ref, b1_ref, w2x_ref, w2a_ref,
                               b2_ref, w3_ref, b3_ref, o_ref):
    """Fused MLP, specialised for output_size == 1 (DDPG value head)."""
    # Layer 1: MXU matmul (low-precision in, f32 accumulate), f32 bias + ReLU.
    x = jnp.dot(s_ref[...], w1_ref[...], preferred_element_type=jnp.float32)
    x = jnp.maximum(x + b1_ref[...], 0.0)
    # Layer 2: concat([x, action]) @ W2 == x @ W2x + action @ W2a.
    h = jnp.dot(x.astype(w2x_ref.dtype), w2x_ref[...],
                preferred_element_type=jnp.float32)
    h = h + jnp.dot(a_ref[...], w2a_ref[...],
                    preferred_element_type=jnp.float32)
    h = jnp.maximum(h + b2_ref[...], 0.0)
    # Layer 3 (N == 1): VPU multiply + cross-lane reduce instead of an N=1 MXU
    # matmul; scalar bias comes from SMEM.
    w3 = w3_ref[...].astype(jnp.float32)                    # (1, H_pad)
    o_ref[...] = jnp.sum(h * w3, axis=-1, keepdims=True) + b3_ref[0, 0]


def _critic_kernel_mxu_head(s_ref, a_ref, w1_ref, b1_ref, w2x_ref, w2a_ref,
                            b2_ref, w3_ref, b3_ref, o_ref):
    """Fused MLP, general output_size (layer 3 on the MXU)."""
    x = jnp.dot(s_ref[...], w1_ref[...], preferred_element_type=jnp.float32)
    x = jnp.maximum(x + b1_ref[...], 0.0)
    h = jnp.dot(x.astype(w2x_ref.dtype), w2x_ref[...],
                preferred_element_type=jnp.float32)
    h = h + jnp.dot(a_ref[...], w2a_ref[...],
                    preferred_element_type=jnp.float32)
    h = jnp.maximum(h + b2_ref[...], 0.0)
    o_ref[...] = (jnp.dot(h.astype(w3_ref.dtype), w3_ref[...],
                          preferred_element_type=jnp.float32) + b3_ref[...])


# ---------------------------------------------------------------------------
# Wrapper
# ---------------------------------------------------------------------------
def critic_ddpg_forward(state, action, params, *, block_b=512,
                        compute_dtype=jnp.bfloat16):
    """Fused 3-layer DDPG critic forward.

    state : (B, S) f32, action : (B, A) f32
    params: dict with w1 (S,H), b1 (1,H), w2x (H,H), w2a (A,H), b2 (1,H),
            w3 (H,O), b3 (1,O).  Weights stored (in, out) vs torch's (out, in).
    Returns (B, O) float32.
    """
    B, S = state.shape
    A = action.shape[1]
    H = params["w1"].shape[1]
    O = params["w3"].shape[1]

    # MXU / vreg friendly padding (exact: padded units are zero end-to-end).
    S_pad = _round_up(S, 8)
    A_pad = _round_up(A, 8)
    H_pad = _round_up(H, 128)

    # Batch tile: multiple of 8 sublanes; small batches stay small.
    TB = min(_round_up(block_b, 8), _round_up(B, 8))
    B_pad = _round_up(B, TB)
    grid = (B_pad // TB,)

    f32 = jnp.float32
    cdt = compute_dtype

    state_p = _pad2(state.astype(f32), (B_pad, S_pad)).astype(cdt)
    action_p = _pad2(action.astype(f32), (B_pad, A_pad)).astype(cdt)
    w1 = _pad2(params["w1"], (S_pad, H_pad)).astype(cdt)
    b1 = _pad2(params["b1"], (1, H_pad)).astype(f32)
    w2x = _pad2(params["w2x"], (H_pad, H_pad)).astype(cdt)
    w2a = _pad2(params["w2a"], (A_pad, H_pad)).astype(cdt)
    b2 = _pad2(params["b2"], (1, H_pad)).astype(f32)

    def batch_spec(cols):
        return pl.BlockSpec((TB, cols), lambda i: (i, 0))

    def pinned(shape):
        return pl.BlockSpec(shape, lambda i: (0, 0))

    if O == 1:
        kernel = _critic_kernel_scalar_head
        w3 = _pad2(params["w3"].T, (1, H_pad)).astype(cdt)      # (1, H_pad)
        b3 = params["b3"].reshape(1, 1).astype(f32)
        w3_spec = pinned((1, H_pad))
        b3_spec = pl.BlockSpec((1, 1), lambda i: (0, 0),
                               memory_space=pltpu.MemorySpace.SMEM)
    else:
        kernel = _critic_kernel_mxu_head
        w3 = _pad2(params["w3"], (H_pad, O)).astype(cdt)
        b3 = params["b3"].astype(f32)
        w3_spec = pinned((H_pad, O))
        b3_spec = pinned((1, O))

    operands = (state_p, action_p, w1, b1, w2x, w2a, b2, w3, b3)

    flops = 2 * B_pad * (S_pad * H_pad + H_pad * H_pad + A_pad * H_pad
                         + H_pad * O)
    bytes_accessed = int(sum(a.size * a.dtype.itemsize for a in operands)
                         + B_pad * O * 4)

    out = pl.pallas_call(
        kernel,
        out_shape=jax.ShapeDtypeStruct((B_pad, O), f32),
        grid=grid,
        in_specs=[
            batch_spec(S_pad),            # state tile   (TB, S_pad)
            batch_spec(A_pad),            # action tile  (TB, A_pad)
            pinned((S_pad, H_pad)),       # w1
            pinned((1, H_pad)),           # b1
            pinned((H_pad, H_pad)),       # w2x
            pinned((A_pad, H_pad)),       # w2a
            pinned((1, H_pad)),           # b2
            w3_spec,                      # w3
            b3_spec,                      # b3
        ],
        out_specs=pl.BlockSpec((TB, O), lambda i: (i, 0)),
        compiler_params=pltpu.CompilerParams(
            dimension_semantics=("parallel",),
            vmem_limit_bytes=64 * 1024 * 1024,
        ),
        cost_estimate=pl.CostEstimate(flops=flops, transcendentals=0,
                                      bytes_accessed=bytes_accessed),
    )(*operands)
    return out[:B]


# ---------------------------------------------------------------------------
# Init mirroring the PyTorch module's __init__ (weights stored (in, out)).
# ---------------------------------------------------------------------------
def init_params(key, state_space, action_space, hidden_size, output_size,
                last_layer_weight_init=0.0003):
    k = jax.random.split(key, 6)
    s_bound = math.sqrt(1.0 / state_space)
    h_bound = math.sqrt(1.0 / hidden_size)
    l2_in = hidden_size + action_space
    l2_bias_bound = 1.0 / math.sqrt(l2_in)
    l3_bias_bound = 1.0 / math.sqrt(hidden_size)

    w1 = jax.random.uniform(k[0], (state_space, hidden_size), jnp.float32,
                            -s_bound, s_bound)
    b1 = jax.random.uniform(k[1], (1, hidden_size), jnp.float32,
                            -s_bound, s_bound)
    w2 = jax.random.uniform(k[2], (l2_in, hidden_size), jnp.float32,
                            -h_bound, h_bound)
    b2 = jax.random.uniform(k[3], (1, hidden_size), jnp.float32,
                            -l2_bias_bound, l2_bias_bound)
    w3 = jax.random.uniform(k[4], (hidden_size, output_size), jnp.float32,
                            -last_layer_weight_init, last_layer_weight_init)
    b3 = jax.random.uniform(k[5], (1, output_size), jnp.float32,
                            -l3_bias_bound, l3_bias_bound)
    return {
        "w1": w1, "b1": b1,
        "w2x": w2[:hidden_size, :], "w2a": w2[hidden_size:, :], "b2": b2,
        "w3": w3, "b3": b3,
    }


def _reference(state, action, p):
    x = jnp.maximum(state @ p["w1"] + p["b1"], 0.0)
    h = jnp.concatenate([x, action], axis=1)
    w2 = jnp.concatenate([p["w2x"], p["w2a"]], axis=0)
    h = jnp.maximum(h @ w2 + p["b2"], 0.0)
    return h @ p["w3"] + p["b3"]


if __name__ == "__main__":
    B, STATE, ACTION, HIDDEN, OUT = 2, 8, 4, 32, 1
    key = jax.random.PRNGKey(0)
    k_s, k_a, k_p = jax.random.split(key, 3)
    state = jax.random.normal(k_s, (B, STATE), jnp.float32)
    action = jax.random.normal(k_a, (B, ACTION), jnp.float32)
    params = init_params(k_p, STATE, ACTION, HIDDEN, OUT)
    ref = _reference(state, action, params)

    # f32 compute path: exactness of tiling / padding / split-weight concat.
    out_f32 = jax.block_until_ready(
        critic_ddpg_forward(state, action, params, compute_dtype=jnp.float32))
    assert out_f32.shape == (B, OUT)
    assert jnp.allclose(out_f32, ref, atol=1e-4, rtol=1e-4)

    # Default bf16-MXU path (f32 accumulation): looser tolerance.
    out_bf16 = jax.block_until_ready(
        critic_ddpg_forward(state, action, params))
    assert out_bf16.shape == (B, OUT)
    assert jnp.allclose(out_bf16, ref, atol=2e-2, rtol=2e-2)

    # Multi-step grid path: uneven batch, several batch tiles.
    B2 = 50
    k_s2, k_a2 = jax.random.split(jax.random.PRNGKey(1))
    state2 = jax.random.normal(k_s2, (B2, STATE), jnp.float32)
    action2 = jax.random.normal(k_a2, (B2, ACTION), jnp.float32)
    ref2 = _reference(state2, action2, params)
    out2 = jax.block_until_ready(
        critic_ddpg_forward(state2, action2, params, block_b=16,
                            compute_dtype=jnp.float32))
    assert out2.shape == (B2, OUT)
    assert jnp.allclose(out2, ref2, atol=1e-4, rtol=1e-4)

    print("KERNEL_OK")
</pallas_src>

<mosaic_0001>
module attributes {stable_mosaic.version = 11 : i64} {
  func.func @_critic_kernel_scalar_head(%arg0: i32, %arg1: memref<8x8xf32, #tpu.memory_space<vmem>>, %arg2: memref<8x8xf32, #tpu.memory_space<vmem>>, %arg3: memref<8x128xf32, #tpu.memory_space<vmem>>, %arg4: memref<1x128xf32, #tpu.memory_space<vmem>>, %arg5: memref<128x128xf32, #tpu.memory_space<vmem>>, %arg6: memref<8x128xf32, #tpu.memory_space<vmem>>, %arg7: memref<1x128xf32, #tpu.memory_space<vmem>>, %arg8: memref<1x128xf32, #tpu.memory_space<vmem>>, %arg9: memref<1x1xf32, #tpu.memory_space<smem>>, %arg10: memref<8x1xf32, #tpu.memory_space<vmem>>) attributes {dimension_semantics = [#tpu.dimension_semantics<parallel>], iteration_bounds = array<i64: 1>, scalar_prefetch = 0 : i64, scratch_operands = 0 : i64, tpu.core_type = #tpu.core_type<tc>, window_params = [{transform_indices = @transform_0, window_bounds = array<i64: 8, 8>}, {transform_indices = @transform_1, window_bounds = array<i64: 8, 8>}, {pipeline_mode = #tpu.pipeline_mode<synchronous>, transform_indices = @transform_2, window_bounds = array<i64: 8, 128>}, {pipeline_mode = #tpu.pipeline_mode<synchronous>, transform_indices = @transform_3, window_bounds = array<i64: 1, 128>}, {pipeline_mode = #tpu.pipeline_mode<synchronous>, transform_indices = @transform_4, window_bounds = array<i64: 128, 128>}, {pipeline_mode = #tpu.pipeline_mode<synchronous>, transform_indices = @transform_5, window_bounds = array<i64: 8, 128>}, {pipeline_mode = #tpu.pipeline_mode<synchronous>, transform_indices = @transform_6, window_bounds = array<i64: 1, 128>}, {pipeline_mode = #tpu.pipeline_mode<synchronous>, transform_indices = @transform_7, window_bounds = array<i64: 1, 128>}, {transform_indices = @transform_8, window_bounds = array<i64: 1, 1>}, {transform_indices = @transform_9, window_bounds = array<i64: 8, 1>}]} {
    %c0 = arith.constant 0 : index
    %c0_0 = arith.constant 0 : index
    %0 = vector.load %arg1[%c0, %c0_0] : memref<8x8xf32, #tpu.memory_space<vmem>>, vector<8x8xf32>
    %c0_1 = arith.constant 0 : index
    %c0_2 = arith.constant 0 : index
    %1 = vector.load %arg3[%c0_1, %c0_2] : memref<8x128xf32, #tpu.memory_space<vmem>>, vector<8x128xf32>
    %cst = arith.constant dense<0.000000e+00> : vector<8x128xf32>
    %2 = tpu.matmul %0, %1, %cst {dimension_numbers = #tpu.dot_dimension_numbers<[1], [0], [0], [1], [0, 0, 1, 1], [], []>} : vector<8x8xf32>, vector<8x128xf32>, vector<8x128xf32> -> vector<8x128xf32>
    %c0_3 = arith.constant 0 : index
    %c0_4 = arith.constant 0 : index
    %3 = vector.load %arg4[%c0_3, %c0_4] : memref<1x128xf32, #tpu.memory_space<vmem>>, vector<1x128xf32>
    %4 = vector.broadcast %3 : vector<1x128xf32> to vector<8x128xf32>
    %5 = arith.addf %2, %4 : vector<8x128xf32>
    %cst_5 = arith.constant 0.000000e+00 : f32
    %6 = vector.broadcast %cst_5 : f32 to vector<8x128xf32>
    %7 = arith.maximumf %5, %6 : vector<8x128xf32>
    %c0_6 = arith.constant 0 : index
    %c0_7 = arith.constant 0 : index
    %8 = vector.load %arg5[%c0_6, %c0_7] : memref<128x128xf32, #tpu.memory_space<vmem>>, vector<128x128xf32>
    %cst_8 = arith.constant dense<0.000000e+00> : vector<8x128xf32>
    %9 = tpu.matmul %7, %8, %cst_8 {dimension_numbers = #tpu.dot_dimension_numbers<[1], [0], [0], [1], [0, 0, 1, 1], [], []>} : vector<8x128xf32>, vector<128x128xf32>, vector<8x128xf32> -> vector<8x128xf32>
    %c0_9 = arith.constant 0 : index
    %c0_10 = arith.constant 0 : index
    %10 = vector.load %arg2[%c0_9, %c0_10] : memref<8x8xf32, #tpu.memory_space<vmem>>, vector<8x8xf32>
    %c0_11 = arith.constant 0 : index
    %c0_12 = arith.constant 0 : index
    %11 = vector.load %arg6[%c0_11, %c0_12] : memref<8x128xf32, #tpu.memory_space<vmem>>, vector<8x128xf32>
    %cst_13 = arith.constant dense<0.000000e+00> : vector<8x128xf32>
    %12 = tpu.matmul %10, %11, %cst_13 {dimension_numbers = #tpu.dot_dimension_numbers<[1], [0], [0], [1], [0, 0, 1, 1], [], []>} : vector<8x8xf32>, vector<8x128xf32>, vector<8x128xf32> -> vector<8x128xf32>
    %13 = arith.addf %9, %12 : vector<8x128xf32>
    %c0_14 = arith.constant 0 : index
    %c0_15 = arith.constant 0 : index
    %14 = vector.load %arg7[%c0_14, %c0_15] : memref<1x128xf32, #tpu.memory_space<vmem>>, vector<1x128xf32>
    %15 = vector.broadcast %14 : vector<1x128xf32> to vector<8x128xf32>
    %16 = arith.addf %13, %15 : vector<8x128xf32>
    %cst_16 = arith.constant 0.000000e+00 : f32
    %17 = vector.broadcast %cst_16 : f32 to vector<8x128xf32>
    %18 = arith.maximumf %16, %17 : vector<8x128xf32>
    %c0_17 = arith.constant 0 : index
    %c0_18 = arith.constant 0 : index
    %19 = vector.load %arg8[%c0_17, %c0_18] : memref<1x128xf32, #tpu.memory_space<vmem>>, vector<1x128xf32>
    %20 = vector.broadcast %19 : vector<1x128xf32> to vector<8x128xf32>
    %21 = arith.mulf %18, %20 : vector<8x128xf32>
    %cst_19 = arith.constant dense<0.000000e+00> : vector<8xf32>
    %22 = vector.multi_reduction <add>, %21, %cst_19 [1] : vector<8x128xf32> to vector<8xf32>
    %23 = vector.shape_cast %22 : vector<8xf32> to vector<8x1xf32>
    %c0_20 = arith.constant 0 : index
    %c0_21 = arith.constant 0 : index
    %24 = memref.load %arg9[%c0_20, %c0_21] : memref<1x1xf32, #tpu.memory_space<smem>>
    %25 = vector.broadcast %24 : f32 to vector<8x1xf32>
    %26 = arith.addf %23, %25 : vector<8x1xf32>
    %c0_22 = arith.constant 0 : index
    %c0_23 = arith.constant 0 : index
    %27 = vector.load %arg10[%c0_22, %c0_23] : memref<8x1xf32, #tpu.memory_space<vmem>>, vector<8x1xf32>
    tpu.vector_store %arg10[%c0_22, %c0_23], %26 {strides = array<i32>} : memref<8x1xf32, #tpu.memory_space<vmem>>, vector<8x1xf32>,
    return
  }
  func.func @transform_0(%arg0: i32) -> (i32, i32) {
    %c0_i32 = arith.constant 0 : i32
    %c0_i32_0 = arith.constant 0 : i32
    return %arg0, %c0_i32 : i32, i32
  }
  func.func @transform_1(%arg0: i32) -> (i32, i32) {
    %c0_i32 = arith.constant 0 : i32
    %c0_i32_0 = arith.constant 0 : i32
    return %arg0, %c0_i32 : i32, i32
  }
  func.func @transform_2(%arg0: i32) -> (i32, i32) {
    %c0_i32 = arith.constant 0 : i32
    %c0_i32_0 = arith.constant 0 : i32
    %c0_i32_1 = arith.constant 0 : i32
    return %c0_i32, %c0_i32_0 : i32, i32
  }
  func.func @transform_3(%arg0: i32) -> (i32, i32) {
    %c0_i32 = arith.constant 0 : i32
    %c0_i32_0 = arith.constant 0 : i32
    %c0_i32_1 = arith.constant 0 : i32
    return %c0_i32, %c0_i32_0 : i32, i32
  }
  func.func @transform_4(%arg0: i32) -> (i32, i32) {
    %c0_i32 = arith.constant 0 : i32
    %c0_i32_0 = arith.constant 0 : i32
    %c0_i32_1 = arith.constant 0 : i32
    return %c0_i32, %c0_i32_0 : i32, i32
  }
  func.func @transform_5(%arg0: i32) -> (i32, i32) {
    %c0_i32 = arith.constant 0 : i32
    %c0_i32_0 = arith.constant 0 : i32
    %c0_i32_1 = arith.constant 0 : i32
    return %c0_i32, %c0_i32_0 : i32, i32
  }
  func.func @transform_6(%arg0: i32) -> (i32, i32) {
    %c0_i32 = arith.constant 0 : i32
    %c0_i32_0 = arith.constant 0 : i32
    %c0_i32_1 = arith.constant 0 : i32
    return %c0_i32, %c0_i32_0 : i32, i32
  }
  func.func @transform_7(%arg0: i32) -> (i32, i32) {
    %c0_i32 = arith.constant 0 : i32
    %c0_i32_0 = arith.constant 0 : i32
    %c0_i32_1 = arith.constant 0 : i32
    return %c0_i32, %c0_i32_0 : i32, i32
  }
  func.func @transform_8(%arg0: i32) -> (i32, i32) {
    %c0_i32 = arith.constant 0 : i32
    %c0_i32_0 = arith.constant 0 : i32
    %c0_i32_1 = arith.constant 0 : i32
    return %c0_i32, %c0_i32_0 : i32, i32
  }
  func.func @transform_9(%arg0: i32) -> (i32, i32) {
    %c0_i32 = arith.constant 0 : i32
    %c0_i32_0 = arith.constant 0 : i32
    return %arg0, %c0_i32 : i32, i32
  }
}

</mosaic_0001>

<llo_original>
// kernel: tpu_custom_call.1
$region0: #{tpu_custom_call.1}
  #allocation0 [shape = 'u32[]', space=smem, size = 0x4, offset = 0x4, fixed_abs, tag = 'smem constant byte address 0x4 - core index']
  #allocation1 [shape = 'u32[72,128]{1,0:T(1,128)}', space=vmem, size = 0x9000, scoped, tag = 'internal scratch']
  #allocation2 [shape = 'f32[1,1]{1,0:T(1,128)S(6)}', space=smem, size = 0x200, scoped, tag = 'scoped memory for tpu_custom_call.1']
  %s0 = inlined_call_operand.hbm [shape: f32[8,8], index: 0, kind: input, shape index: {}]
  %s1 = inlined_call_operand.hbm [shape: f32[8,8], index: 1, kind: input, shape index: {}]
  %s2 = inlined_call_operand.hbm [shape: f32[8,128], index: 2, kind: input, shape index: {}]
  %s3 = inlined_call_operand.vmem [shape: f32[1,128], index: 3, kind: input, shape index: {}]
  %s4 = inlined_call_operand.hbm [shape: f32[128,128], index: 4, kind: input, shape index: {}]
  %s5 = inlined_call_operand.hbm [shape: f32[8,128], index: 5, kind: input, shape index: {}]
  %s6 = inlined_call_operand.vmem [shape: f32[1,128], index: 6, kind: input, shape index: {}]
  %s7 = inlined_call_operand.vmem [shape: f32[1,128], index: 7, kind: input, shape index: {}]
  %s8 = inlined_call_operand.<no memory space> [shape: f32[1,1], index: 8, kind: input, shape index: {}]
  %s9 = inlined_call_operand.vmem [shape: f32[8,1], index: 9, kind: output, shape index: {}]
  %s10 = sld [smem:[#allocation0]]
  $region66: #{tpu_custom_call.1} parent=0
    _
  %s12 = ssub.s32 1, %s10
  %s13 = scalar_select 0, %s12, %s10
  %14 = sst [smem:[#allocation2]] %s8
  $region1: #{tpu_custom_call.1} parent=0
    #allocation3 [shape = 'u8[4096]{0}', space=vmem, size = 0x1000, scoped, tag = 'input window, operand 0, single buffered']
    #allocation4 [shape = 's32[1]{0}', space=sflag, size = 0x4, scoped, tag = 'scoped memory for tpu_custom_call.1']
    #allocation5 [shape = 'u8[4096]{0}', space=vmem, size = 0x1000, scoped, tag = 'input window, operand 1, single buffered']
    #allocation6 [shape = 's32[1]{0}', space=sflag, size = 0x4, scoped, tag = 'scoped memory for tpu_custom_call.1']
    #allocation7 [shape = 'u8[4096]{0}', space=vmem, size = 0x1000, scoped, tag = 'input window, operand 2, single buffered']
    #allocation8 [shape = 'u8[65536]{0}', space=vmem, size = 0x10000, scoped, tag = 'input window, operand 4, single buffered']
    #allocation9 [shape = 's32[1]{0}', space=sflag, size = 0x4, scoped, tag = 'scoped memory for tpu_custom_call.1']
    #allocation10 [shape = 'u8[4096]{0}', space=vmem, size = 0x1000, scoped, tag = 'input window, operand 5, single buffered']
    %15 = vsyncpa [#allocation4], 0
    %16 = vsyncpa [#allocation6], 0
    %17 = vsyncpa [#allocation9], 0
    // Predicated region
    $region2: #{tpu_custom_call.1} parent=1 // pred_check
      _
    $region3: #{tpu_custom_call.1} parent=1 // pred_check_branch
      %19 = sbr.rel (0) target = $region5
    $region4: #{tpu_custom_call.1} parent=1 // pred_region
      %21 = vsyncadd [#allocation4], 0
      %s23 = sshll.u32 %s0, 4
      %s24 = int_to_ptr.hbm [resolvable:$true] %s23
      %s25 = sshll.u32 [#allocation3], 4
      %s26 = int_to_ptr.vmem [resolvable:$true] %s25
      %28 = dma.hbm_to_vmem [thread:$0]  %s24, 128, %s26, [#allocation4]
    $region5: #{tpu_custom_call.1} parent=1 // pred_fallthru
      _
    // Predicated region
    $region6: #{tpu_custom_call.1} parent=1 // pred_check
      _
    $region7: #{tpu_custom_call.1} parent=1 // pred_check_branch
      %30 = sbr.rel (0) target = $region9
    $region8: #{tpu_custom_call.1} parent=1 // pred_region
      %32 = vsyncadd [#allocation6], 0
      %s34 = sshll.u32 %s1, 4
      %s35 = int_to_ptr.hbm [resolvable:$true] %s34
      %s36 = sshll.u32 [#allocation5], 4
      %s37 = int_to_ptr.vmem [resolvable:$true] %s36
      %39 = dma.hbm_to_vmem [thread:$0]  %s35, 128, %s37, [#allocation6]
    $region9: #{tpu_custom_call.1} parent=1 // pred_fallthru
      _
    // Predicated region
    $region10: #{tpu_custom_call.1} parent=1 // pred_check
      _
    $region11: #{tpu_custom_call.1} parent=1 // pred_check_branch
      %41 = sbr.rel (0) target = $region13
    $region12: #{tpu_custom_call.1} parent=1 // pred_region
      %43 = vsyncadd [#allocation6], 0
      %s45 = sshll.u32 %s2, 4
      %s46 = int_to_ptr.hbm [resolvable:$true] %s45
      %s47 = sshll.u32 [#allocation7], 4
      %s48 = int_to_ptr.vmem [resolvable:$true] %s47
      %50 = dma.hbm_to_vmem [thread:$0]  %s46, 128, %s48, [#allocation6]
    $region13: #{tpu_custom_call.1} parent=1 // pred_fallthru
      _
    // Predicated region
    $region14: #{tpu_custom_call.1} parent=1 // pred_check
      _
    $region15: #{tpu_custom_call.1} parent=1 // pred_check_branch
      %52 = sbr.rel (0) target = $region17
    $region16: #{tpu_custom_call.1} parent=1 // pred_region
      _
    $region17: #{tpu_custom_call.1} parent=1 // pred_fallthru
      _
    // Predicated region
    $region18: #{tpu_custom_call.1} parent=1 // pred_check
      _
    $region19: #{tpu_custom_call.1} parent=1 // pred_check_branch
      %54 = sbr.rel (0) target = $region21
    $region20: #{tpu_custom_call.1} parent=1 // pred_region
      %56 = vsyncadd [#allocation9], 0
      %s57 = sshll.u32 %s4, 4
      %s58 = int_to_ptr.hbm [resolvable:$true] %s57
      %s59 = sshll.u32 [#allocation8], 4
      %s60 = int_to_ptr.vmem [resolvable:$true] %s59
      %65 = dma.hbm_to_vmem [thread:$0]  %s58, 2048, %s60, [#allocation9], 128, 128, 8
    $region21: #{tpu_custom_call.1} parent=1 // pred_fallthru
      _
    // Predicated region
    $region22: #{tpu_custom_call.1} parent=1 // pred_check
      _
    $region23: #{tpu_custom_call.1} parent=1 // pred_check_branch
      %67 = sbr.rel (0) target = $region25
    $region24: #{tpu_custom_call.1} parent=1 // pred_region
      %69 = vsyncadd [#allocation9], 0
      %s71 = sshll.u32 %s5, 4
      %s72 = int_to_ptr.hbm [resolvable:$true] %s71
      %s73 = sshll.u32 [#allocation10], 4
      %s74 = int_to_ptr.vmem [resolvable:$true] %s73
      %76 = dma.hbm_to_vmem [thread:$0]  %s72, 128, %s74, [#allocation9]
    $region25: #{tpu_custom_call.1} parent=1 // pred_fallthru
      _
    // Predicated region
    $region26: #{tpu_custom_call.1} parent=1 // pred_check
      _
    $region27: #{tpu_custom_call.1} parent=1 // pred_check_branch
      %78 = sbr.rel (0) target = $region29
    $region28: #{tpu_custom_call.1} parent=1 // pred_region
      _
    $region29: #{tpu_custom_call.1} parent=1 // pred_fallthru
      _
    // Predicated region
    $region30: #{tpu_custom_call.1} parent=1 // pred_check
      _
    $region31: #{tpu_custom_call.1} parent=1 // pred_check_branch
      %80 = sbr.rel (0) target = $region33
    $region32: #{tpu_custom_call.1} parent=1 // pred_region
      _
    $region33: #{tpu_custom_call.1} parent=1 // pred_fallthru
      _
    // Predicated region
    $region34: #{tpu_custom_call.1} parent=1 // pred_check
      _
    $region35: #{tpu_custom_call.1} parent=1 // pred_check_branch
      %82 = sbr.rel (0) target = $region37
    $region36: #{tpu_custom_call.1} parent=1 // pred_region
      _
    $region37: #{tpu_custom_call.1} parent=1 // pred_fallthru
      _
    // Predicated region
    $region38: #{tpu_custom_call.1} parent=1 // pred_check
      _
    $region39: #{tpu_custom_call.1} parent=1 // pred_check_branch
      %84 = sbr.rel (0) target = $region41
    $region40: #{tpu_custom_call.1} parent=1 // pred_region
      %86 = dma.done [#allocation4], 128
    $region41: #{tpu_custom_call.1} parent=1 // pred_fallthru
      _
    // Predicated region
    $region42: #{tpu_custom_call.1} parent=1 // pred_check
      _
    $region43: #{tpu_custom_call.1} parent=1 // pred_check_branch
      %88 = sbr.rel (0) target = $region45
    $region44: #{tpu_custom_call.1} parent=1 // pred_region
      %90 = dma.done [#allocation6], 128
    $region45: #{tpu_custom_call.1} parent=1 // pred_fallthru
      _
    // Predicated region
    $region46: #{tpu_custom_call.1} parent=1 // pred_check
      _
    $region47: #{tpu_custom_call.1} parent=1 // pred_check_branch
      %92 = sbr.rel (0) target = $region49
    $region48: #{tpu_custom_call.1} parent=1 // pred_region
      %94 = dma.done [#allocation6], 128
    $region49: #{tpu_custom_call.1} parent=1 // pred_fallthru
      _
    // Predicated region
    $region50: #{tpu_custom_call.1} parent=1 // pred_check
      _
    $region51: #{tpu_custom_call.1} parent=1 // pred_check_branch
      %96 = sbr.rel (0) target = $region53
    $region52: #{tpu_custom_call.1} parent=1 // pred_region
      %98 = dma.done [#allocation9], 2048
    $region53: #{tpu_custom_call.1} parent=1 // pred_fallthru
      _
    // Predicated region
    $region54: #{tpu_custom_call.1} parent=1 // pred_check
      _
    $region55: #{tpu_custom_call.1} parent=1 // pred_check_branch
      %100 = sbr.rel (0) target = $region57
    $region56: #{tpu_custom_call.1} parent=1 // pred_region
      %102 = dma.done [#allocation9], 128
    $region57: #{tpu_custom_call.1} parent=1 // pred_fallthru
      _
    %v103 = vld [vmem:[#allocation3] sm:$0xff]
    %v104 = vld [vmem:[#allocation7] sm:$0xff]
    %v105 = vld [vmem:[%s3] sm:$0x1]
    %v107 = vperm.slane %v105, 0
    %vm109 = vcmask 64512
    %v111 = vsel %vm109, %v103, 0
    %113 = vmatpush.msra.mxu0 0.0
    %114 = vmatpush.msra.mxu0 0.0
    %115 = vmatpush.msra.mxu0 0.0
    %116 = vmatpush.msra.mxu0 0.0
    %117 = vmatpush.msra.mxu0 0.0
    %118 = vmatpush.msra.mxu0 0.0
    %119 = vmatpush.msra.mxu0 0.0
    %120 = vmatpush.msra.mxu0 0.0
    %121 = vmatpush.msra.mxu0 0.0
    %122 = vmatpush.msra.mxu0 0.0
    %123 = vmatpush.msra.mxu0 0.0
    %124 = vmatpush.msra.mxu0 0.0
    %125 = vmatpush.msra.mxu0 0.0
    %126 = vmatpush.msra.mxu0 0.0
    %127 = vmatpush.msra.mxu0 0.0
    %128 = vmatpush.msra.mxu0 %v104
    %129 = vmatmul.f32.gmra.mxu0 %v111
    %v130 = vpop.f32.mrf.mxu0
    %v131 = vadd.f32 %v107, %v130
    %132 = vdwg.mxu0
    %v133 = vmax.f32 %v131, 0.0
    %v134 = vld [vmem:[#allocation8] sm:$0xff]
    %v135 = vld [vmem:[#allocation8 + $0x8] sm:$0xff]
    %v136 = vld [vmem:[#allocation8 + $0x10] sm:$0xff]
    %v137 = vld [vmem:[#allocation8 + $0x18] sm:$0xff]
    %v138 = vld [vmem:[#allocation8 + $0x20] sm:$0xff]
    %v139 = vld [vmem:[#allocation8 + $0x28] sm:$0xff]
    %v140 = vld [vmem:[#allocation8 + $0x30] sm:$0xff]
    %v141 = vld [vmem:[#allocation8 + $0x38] sm:$0xff]
    %v142 = vld [vmem:[#allocation8 + $0x40] sm:$0xff]
    %v143 = vld [vmem:[#allocation8 + $0x48] sm:$0xff]
    %v144 = vld [vmem:[#allocation8 + $0x50] sm:$0xff]
    %v145 = vld [vmem:[#allocation8 + $0x58] sm:$0xff]
    %v146 = vld [vmem:[#allocation8 + $0x60] sm:$0xff]
    %v147 = vld [vmem:[#allocation8 + $0x68] sm:$0xff]
    %v148 = vld [vmem:[#allocation8 + $0x70] sm:$0xff]
    %v149 = vld [vmem:[#allocation8 + $0x78] sm:$0xff]
    %v150 = vld [vmem:[#allocation5] sm:$0xff]
    %v151 = vld [vmem:[#allocation10] sm:$0xff]
    %v153 = vsel %vm109, %v150, 0
    %155 = vmatpush.msra.mxu0 0.0
    %156 = vmatpush.msra.mxu0 0.0
    %157 = vmatpush.msra.mxu0 0.0
    %158 = vmatpush.msra.mxu0 0.0
    %159 = vmatpush.msra.mxu0 0.0
    %160 = vmatpush.msra.mxu0 0.0
    %161 = vmatpush.msra.mxu0 0.0
    %162 = vmatpush.msra.mxu0 0.0
    %163 = vmatpush.msra.mxu0 0.0
    %164 = vmatpush.msra.mxu0 0.0
    %165 = vmatpush.msra.mxu0 0.0
    %166 = vmatpush.msra.mxu0 0.0
    %167 = vmatpush.msra.mxu0 0.0
    %168 = vmatpush.msra.mxu0 0.0
    %169 = vmatpush.msra.mxu0 0.0
    %170 = vmatpush.msra.mxu0 %v151
    %171 = vmatmul.f32.gmra.mxu0 %v153
    %v172 = vpop.f32.mrf.mxu0
    %v173 = vadd.f32 0.0, %v172
    %174 = vdwg.mxu0
    %175 = vmatpush.msra.mxu0 %v149
    %176 = vmatpush.msra.mxu0 %v148
    %177 = vmatpush.msra.mxu0 %v147
    %178 = vmatpush.msra.mxu0 %v146
    %179 = vmatpush.msra.mxu0 %v145
    %180 = vmatpush.msra.mxu0 %v144
    %181 = vmatpush.msra.mxu0 %v143
    %182 = vmatpush.msra.mxu0 %v142
    %183 = vmatpush.msra.mxu0 %v141
    %184 = vmatpush.msra.mxu0 %v140
    %185 = vmatpush.msra.mxu0 %v139
    %186 = vmatpush.msra.mxu0 %v138
    %187 = vmatpush.msra.mxu0 %v137
    %188 = vmatpush.msra.mxu0 %v136
    %189 = vmatpush.msra.mxu0 %v135
    %190 = vmatpush.msra.mxu0 %v134
    %191 = vmatmul.f32.gmra.mxu0 %v133
    %v192 = vpop.f32.mrf.mxu0
    %v193 = vadd.f32 %v173, %v192
    %194 = vdwg.mxu0
    %v195 = vld [vmem:[%s6] sm:$0x1]
    %v197 = vperm.slane %v195, 0
    %v199 = vadd.f32 %v193, %v197
    %v200 = vmax.f32 %v199, 0.0
    %v201 = vld [vmem:[%s7] sm:$0x1]
    %v203 = vperm.slane %v201, 0
    %v205 = vmul.f32 %v200, %v203
    %206 = vadd.xlane.f32.xlu0 %v205
    %v207 = vpop.xlane.xlu0 %206
    %s208 = sld [smem:[#allocation2]]
    %v209 = vstv %s208
    %v210 = vadd.f32 %v207, %v209
    %vm211 = vcmask 7168
    %212 = vst.msk [vmem:[%s9] sm:$0xff] %vm211, %v210
    // Predicated region
    $region58: #{tpu_custom_call.1} parent=1 // pred_check
      _
    $region59: #{tpu_custom_call.1} parent=1 // pred_check_branch
      %214 = sbr.rel (0) target = $region61
    $region60: #{tpu_custom_call.1} parent=1 // pred_region
      _
    $region61: #{tpu_custom_call.1} parent=1 // pred_fallthru
      _
    // Predicated region
    $region62: #{tpu_custom_call.1} parent=1 // pred_check
      _
    $region63: #{tpu_custom_call.1} parent=1 // pred_check_branch
      %216 = sbr.rel (0) target = $region65
    $region64: #{tpu_custom_call.1} parent=1 // pred_region
      _
    $region65: #{tpu_custom_call.1} parent=1 // pred_fallthru
      _
    %217 = vsyncpa [#allocation4], 1
    %218 = vsyncpa [#allocation6], 1
    %219 = vsyncpa [#allocation9], 1

</llo_original>
